<compile_context>
chip_gen: v6e
topology: v6e:2x2x1
jax: 0.10.0
libtpu: 0.0.40
codegen_flags: <defaults>
</compile_context>

<pallas_src>
import functools

import jax
import jax.numpy as jnp
from jax.experimental import pallas as pl
from jax.experimental.pallas import tpu as pltpu


def _ln_swish_gate_kernel(x_ref, o_ref, w_ref, y_ref, *, eps, gate_dtype):
    """One (TM, N) row block: LayerNorm(x) * w, gated by o * sigmoid(o)."""
    x = x_ref[...].astype(jnp.float32)
    w = w_ref[...].astype(jnp.float32)            # (1, N), broadcasts over rows

    n = x.shape[-1]
    inv_n = 1.0 / float(n)
    # Centered two-pass statistics (matches the Triton reference; avoids the
    # E[x^2]-E[x]^2 cancellation for inputs with a large DC offset).  The
    # serialized XLU reductions are free in this HBM-bandwidth-bound kernel.
    mean = jnp.sum(x, axis=-1, keepdims=True) * inv_n
    xc = x - mean
    var = jnp.sum(xc * xc, axis=-1, keepdims=True) * inv_n
    rstd = jax.lax.rsqrt(var + eps)
    y = xc * rstd * w

    # Swish gate.  On chips with bf16 VPU/EUP (v6e/v7x) keep the gate in the
    # I/O dtype to halve its vreg/VMEM footprint; on v5e it is computed in f32.
    o = o_ref[...].astype(gate_dtype)
    gate = (o * jax.nn.sigmoid(o)).astype(jnp.float32)

    y_ref[...] = (y * gate).astype(y_ref.dtype)


def _round_up(a, b):
    return (a + b - 1) // b * b


def _tpu_config():
    """Per-generation knobs: (vmem_capacity_bytes, multi_tensorcore, bf16_vpu)."""
    vmem_cap = 64 << 20            # conservative default (v7x: 64 MiB VMEM / TC)
    multi_tc = True                # assume the grid may be sharded across 2 TCs
    bf16_vpu = True
    try:
        info = pltpu.get_tpu_info()
        vmem_cap = int(getattr(info, "vmem_capacity_bytes", vmem_cap))
    except Exception:
        pass
    try:
        kind = jax.devices()[0].device_kind.lower()
        # v5e / v6e have a single TensorCore per chip -> no megacore split.
        if ("v5e" in kind) or ("v5 lite" in kind) or ("v6" in kind):
            multi_tc = False
        # v5-generation VPU/EUP have no bf16 path.
        if "v5" in kind:
            bf16_vpu = False
    except Exception:
        pass
    return vmem_cap, multi_tc, bf16_vpu


def fused_layer_norm_swish_gate(x, o, weight, eps=1e-5, block_rows=None):
    """x, o: (..., hidden); weight: (hidden,). Returns same shape/dtype as x."""
    orig_shape = x.shape
    n = x.shape[-1]
    x2 = x.reshape(-1, n)
    o2 = o.reshape(-1, n)
    w2 = weight.reshape(1, n)
    m = x2.shape[0]

    itemsize = jnp.dtype(x.dtype).itemsize
    sub = {4: 8, 2: 16, 1: 32}.get(itemsize, 8)   # packed-sublane multiple

    vmem_cap, multi_tc, bf16_vpu = _tpu_config()
    if vmem_cap >= (100 << 20):          # v5e / v6e: 128 MiB physical VMEM
        budget, limit_cap = 80 << 20, 112 << 20
    else:                                # v7x-like: 64 MiB physical VMEM / TC
        budget, limit_cap = 28 << 20, 48 << 20

    # VMEM accounting: the last dim is physically padded to a lane multiple of
    # 128; double-buffered x/o/y streams in the I/O dtype plus ~3 f32
    # in-kernel temporaries of the tile.
    n_lanes = _round_up(n, 128)
    per_row = n_lanes * (6 * itemsize + 3 * 4)

    if block_rows is None:
        tm = budget // max(per_row, 1)
    else:
        tm = int(block_rows)
    tm = max(sub, (tm // sub) * sub)              # packed-sublane multiple
    tm = min(tm, _round_up(m, sub))               # never larger than (rounded) m

    if multi_tc and m >= 8 * sub and pl.cdiv(m, tm) < 8:
        # 2-TC chips: the 'parallel' row axis is sharded across TensorCores;
        # aim for >= 8 row blocks so a ragged tail block doesn't idle one core.
        tm = max(sub, _round_up(pl.cdiv(m, 8), sub))

    grid_m = pl.cdiv(m, tm)                       # tail rows masked by Pallas

    vmem_limit = int(min(max(int(tm * per_row * 1.25) + (4 << 20), 16 << 20),
                         limit_cap))

    gate_dtype = x.dtype if (bf16_vpu and x.dtype == jnp.bfloat16) else jnp.float32
    kernel = functools.partial(_ln_swish_gate_kernel, eps=eps, gate_dtype=gate_dtype)

    cost = pl.CostEstimate(
        flops=10 * m * n,
        transcendentals=m * n,
        bytes_accessed=3 * m * n * itemsize + n * jnp.dtype(weight.dtype).itemsize,
    )

    y2 = pl.pallas_call(
        kernel,
        out_shape=jax.ShapeDtypeStruct((m, n), x.dtype),
        grid_spec=pltpu.PrefetchScalarGridSpec(
            num_scalar_prefetch=0,
            grid=(grid_m,),
            # Last block dim == full hidden size: always legal, and avoids any
            # wrapper-side pad / slice passes over HBM.
            # If profiling shows exposed DMA at block boundaries, try
            # pipeline_mode=pl.Buffered(3) on the x / o specs.
            in_specs=[
                pl.BlockSpec((tm, n), lambda i: (i, 0)),
                pl.BlockSpec((tm, n), lambda i: (i, 0)),
                pl.BlockSpec((1, n), lambda i: (0, 0)),
            ],
            out_specs=pl.BlockSpec((tm, n), lambda i: (i, 0)),
        ),
        compiler_params=pltpu.CompilerParams(
            dimension_semantics=("parallel",),
            vmem_limit_bytes=vmem_limit,
        ),
        cost_estimate=cost,
    )(x2, o2, w2)

    return y2.reshape(orig_shape)


def _reference(x, o, weight, eps=1e-5):
    xf = x.astype(jnp.float32)
    of = o.astype(jnp.float32)
    mean = jnp.mean(xf, axis=-1, keepdims=True)
    var = jnp.mean((xf - mean) ** 2, axis=-1, keepdims=True)
    x_hat = (xf - mean) * jax.lax.rsqrt(var + eps)
    y = x_hat * weight.astype(jnp.float32)
    y = y * of * jax.nn.sigmoid(of)
    return y.astype(x.dtype)


if __name__ == "__main__":
    key = jax.random.PRNGKey(0)
    k1, k2, k3, k4, k5 = jax.random.split(key, 5)

    # Case 1: module defaults (elementwise_affine -> weight=ones, bias=None), f32.
    batch, seq, hidden = 2, 8, 32
    x = jax.random.normal(k1, (batch, seq, hidden), dtype=jnp.float32)
    o = jax.random.normal(k2, (batch, seq, hidden), dtype=jnp.float32)
    weight = jnp.ones((hidden,), dtype=jnp.float32)

    y = fused_layer_norm_swish_gate(x, o, weight, eps=1e-5)
    jax.block_until_ready(y)
    y_ref = _reference(x, o, weight, eps=1e-5)
    assert y.shape == x.shape and y.dtype == x.dtype
    assert jnp.allclose(y, y_ref, atol=1e-3, rtol=1e-3), "f32 mismatch vs reference"

    # Case 2: bf16 I/O, hidden not a multiple of 128, row count not a sublane
    # multiple (exercises the full-dim last block and the masked tail rows).
    batch2, seq2, hidden2 = 3, 5, 160
    xb = jax.random.normal(k3, (batch2, seq2, hidden2), dtype=jnp.float32).astype(jnp.bfloat16)
    ob = jax.random.normal(k4, (batch2, seq2, hidden2), dtype=jnp.float32).astype(jnp.bfloat16)
    wb = 1.0 + 0.1 * jax.random.normal(k5, (hidden2,), dtype=jnp.float32)

    yb = fused_layer_norm_swish_gate(xb, ob, wb, eps=1e-5)
    jax.block_until_ready(yb)
    yb_ref = _reference(xb, ob, wb, eps=1e-5)
    assert yb.shape == xb.shape and yb.dtype == xb.dtype
    diff = jnp.max(jnp.abs(yb.astype(jnp.float32) - yb_ref.astype(jnp.float32)))
    assert diff < 5e-2, f"bf16 mismatch vs reference: {diff}"

    print("KERNEL_OK")
</pallas_src>

<mosaic_0001>
module attributes {stable_mosaic.version = 11 : i64} {
  func.func @_ln_swish_gate_kernel(%arg0: i32, %arg1: memref<16x32xf32, #tpu.memory_space<vmem>>, %arg2: memref<16x32xf32, #tpu.memory_space<vmem>>, %arg3: memref<1x32xf32, #tpu.memory_space<vmem>>, %arg4: memref<16x32xf32, #tpu.memory_space<vmem>>) attributes {dimension_semantics = [#tpu.dimension_semantics<parallel>], iteration_bounds = array<i64: 1>, scalar_prefetch = 0 : i64, scratch_operands = 0 : i64, tpu.core_type = #tpu.core_type<tc>, window_params = [{transform_indices = @transform_0, window_bounds = array<i64: 16, 32>}, {transform_indices = @transform_1, window_bounds = array<i64: 16, 32>}, {pipeline_mode = #tpu.pipeline_mode<synchronous>, transform_indices = @transform_2, window_bounds = array<i64: 1, 32>}, {transform_indices = @transform_3, window_bounds = array<i64: 16, 32>}]} {
    %c0 = arith.constant 0 : index
    %c0_0 = arith.constant 0 : index
    %0 = vector.load %arg1[%c0, %c0_0] : memref<16x32xf32, #tpu.memory_space<vmem>>, vector<16x32xf32>
    %c0_1 = arith.constant 0 : index
    %c0_2 = arith.constant 0 : index
    %1 = vector.load %arg3[%c0_1, %c0_2] : memref<1x32xf32, #tpu.memory_space<vmem>>, vector<1x32xf32>
    %cst = arith.constant dense<0.000000e+00> : vector<16xf32>
    %2 = vector.multi_reduction <add>, %0, %cst [1] : vector<16x32xf32> to vector<16xf32>
    %3 = vector.shape_cast %2 : vector<16xf32> to vector<16x1xf32>
    %cst_3 = arith.constant 3.125000e-02 : f32
    %4 = vector.broadcast %cst_3 : f32 to vector<16x1xf32>
    %5 = arith.mulf %3, %4 : vector<16x1xf32>
    %6 = vector.broadcast %5 : vector<16x1xf32> to vector<16x32xf32>
    %7 = arith.subf %0, %6 : vector<16x32xf32>
    %8 = arith.mulf %7, %7 : vector<16x32xf32>
    %cst_4 = arith.constant dense<0.000000e+00> : vector<16xf32>
    %9 = vector.multi_reduction <add>, %8, %cst_4 [1] : vector<16x32xf32> to vector<16xf32>
    %10 = vector.shape_cast %9 : vector<16xf32> to vector<16x1xf32>
    %cst_5 = arith.constant 3.125000e-02 : f32
    %11 = vector.broadcast %cst_5 : f32 to vector<16x1xf32>
    %12 = arith.mulf %10, %11 : vector<16x1xf32>
    %cst_6 = arith.constant 9.99999974E-6 : f32
    %13 = vector.broadcast %cst_6 : f32 to vector<16x1xf32>
    %14 = arith.addf %12, %13 : vector<16x1xf32>
    %15 = math.rsqrt %14 : vector<16x1xf32>
    %16 = vector.broadcast %15 : vector<16x1xf32> to vector<16x32xf32>
    %17 = arith.mulf %7, %16 : vector<16x32xf32>
    %18 = vector.broadcast %1 : vector<1x32xf32> to vector<16x32xf32>
    %19 = arith.mulf %17, %18 : vector<16x32xf32>
    %c0_7 = arith.constant 0 : index
    %c0_8 = arith.constant 0 : index
    %20 = vector.load %arg2[%c0_7, %c0_8] : memref<16x32xf32, #tpu.memory_space<vmem>>, vector<16x32xf32>
    %21 = arith.negf %20 : vector<16x32xf32>
    %22 = math.exp %21 : vector<16x32xf32>
    %cst_9 = arith.constant 1.000000e+00 : f32
    %23 = vector.broadcast %cst_9 : f32 to vector<16x32xf32>
    %24 = arith.addf %23, %22 : vector<16x32xf32>
    %25 = arith.divf %23, %24 : vector<16x32xf32>
    %26 = arith.mulf %20, %25 : vector<16x32xf32>
    %27 = arith.mulf %19, %26 : vector<16x32xf32>
    %c0_10 = arith.constant 0 : index
    %c0_11 = arith.constant 0 : index
    %28 = vector.load %arg4[%c0_10, %c0_11] : memref<16x32xf32, #tpu.memory_space<vmem>>, vector<16x32xf32>
    tpu.vector_store %arg4[%c0_10, %c0_11], %27 {strides = array<i32>} : memref<16x32xf32, #tpu.memory_space<vmem>>, vector<16x32xf32>,
    return
  }
  func.func @transform_0(%arg0: i32) -> (i32, i32) {
    %c0_i32 = arith.constant 0 : i32
    %c0_i32_0 = arith.constant 0 : i32
    return %arg0, %c0_i32 : i32, i32
  }
  func.func @transform_1(%arg0: i32) -> (i32, i32) {
    %c0_i32 = arith.constant 0 : i32
    %c0_i32_0 = arith.constant 0 : i32
    return %arg0, %c0_i32 : i32, i32
  }
  func.func @transform_2(%arg0: i32) -> (i32, i32) {
    %c0_i32 = arith.constant 0 : i32
    %c0_i32_0 = arith.constant 0 : i32
    %c0_i32_1 = arith.constant 0 : i32
    return %c0_i32, %c0_i32_0 : i32, i32
  }
  func.func @transform_3(%arg0: i32) -> (i32, i32) {
    %c0_i32 = arith.constant 0 : i32
    %c0_i32_0 = arith.constant 0 : i32
    return %arg0, %c0_i32 : i32, i32
  }
}

</mosaic_0001>

<llo_original>
// kernel: tpu_custom_call.1
$region0: #{tpu_custom_call.1}
  #allocation0 [shape = 'u32[]', space=smem, size = 0x4, offset = 0x4, fixed_abs, tag = 'smem constant byte address 0x4 - core index']
  #allocation1 [shape = 'u32[144,128]{1,0:T(1,128)}', space=vmem, size = 0x12000, scoped, tag = 'internal scratch']
  %s0 = inlined_call_operand.hbm [shape: f32[16,32], index: 0, kind: input, shape index: {}]
  %s1 = inlined_call_operand.hbm [shape: f32[16,32], index: 1, kind: input, shape index: {}]
  %s2 = inlined_call_operand.vmem [shape: f32[1,32], index: 2, kind: input, shape index: {}]
  %s3 = inlined_call_operand.hbm [shape: f32[16,32], index: 3, kind: output, shape index: {}]
  %s4 = sld [smem:[#allocation0]]
  $region30: #{tpu_custom_call.1} parent=0
    _
  %s6 = ssub.s32 1, %s4
  %s7 = scalar_select 0, %s6, %s4
  $region1: #{tpu_custom_call.1} parent=0
    #allocation2 [shape = 'u8[8192]{0}', space=vmem, size = 0x2000, scoped, tag = 'input window, operand 0, single buffered']
    #allocation3 [shape = 's32[1]{0}', space=sflag, size = 0x4, scoped, tag = 'scoped memory for tpu_custom_call.1']
    #allocation4 [shape = 's32[1]{0}', space=sflag, size = 0x4, scoped, tag = 'scoped memory for tpu_custom_call.1']
    #allocation5 [shape = 'u8[8192]{0}', space=vmem, size = 0x2000, scoped, tag = 'input window, operand 1, single buffered']
    #allocation6 [shape = 's32[1]{0}', space=sflag, size = 0x4, scoped, tag = 'scoped memory for tpu_custom_call.1']
    #allocation7 [shape = 'u8[8192]{0}', space=vmem, size = 0x2000, scoped, tag = 'output window, operand 0, single buffered']
    %8 = vsyncpa [#allocation3], 0
    %9 = vsyncpa [#allocation6], 0
    %10 = vsyncpa [#allocation4], 0
    // Predicated region
    $region2: #{tpu_custom_call.1} parent=1 // pred_check
      _
    $region3: #{tpu_custom_call.1} parent=1 // pred_check_branch
      %12 = sbr.rel (0) target = $region5
    $region4: #{tpu_custom_call.1} parent=1 // pred_region
      %s14 = ssub.s32 256, 256
      %15 = vsyncadd [#allocation3], %s14
      %s16 = sshll.u32 [#allocation2], 4
      %s17 = int_to_ptr.vmem [resolvable:$true] %s16
      %22 = dma.hbm_to_vmem [thread:$0]  %s0, 256, %s17, [#allocation3], 128, 128, 8
    $region5: #{tpu_custom_call.1} parent=1 // pred_fallthru
      _
    // Predicated region
    $region6: #{tpu_custom_call.1} parent=1 // pred_check
      _
    $region7: #{tpu_custom_call.1} parent=1 // pred_check_branch
      %24 = sbr.rel (0) target = $region9
    $region8: #{tpu_custom_call.1} parent=1 // pred_region
      %s26 = ssub.s32 256, 256
      %27 = vsyncadd [#allocation6], %s26
      %s28 = sshll.u32 [#allocation5], 4
      %s29 = int_to_ptr.vmem [resolvable:$true] %s28
      %34 = dma.hbm_to_vmem [thread:$0]  %s1, 256, %s29, [#allocation6], 128, 128, 8
    $region9: #{tpu_custom_call.1} parent=1 // pred_fallthru
      _
    // Predicated region
    $region10: #{tpu_custom_call.1} parent=1 // pred_check
      _
    $region11: #{tpu_custom_call.1} parent=1 // pred_check_branch
      %36 = sbr.rel (0) target = $region13
    $region12: #{tpu_custom_call.1} parent=1 // pred_region
      _
    $region13: #{tpu_custom_call.1} parent=1 // pred_fallthru
      _
    // Predicated region
    $region14: #{tpu_custom_call.1} parent=1 // pred_check
      _
    $region15: #{tpu_custom_call.1} parent=1 // pred_check_branch
      %38 = sbr.rel (0) target = $region17
    $region16: #{tpu_custom_call.1} parent=1 // pred_region
      %39 = dma.done [#allocation3], 256
    $region17: #{tpu_custom_call.1} parent=1 // pred_fallthru
      _
    // Predicated region
    $region18: #{tpu_custom_call.1} parent=1 // pred_check
      _
    $region19: #{tpu_custom_call.1} parent=1 // pred_check_branch
      %41 = sbr.rel (0) target = $region21
    $region20: #{tpu_custom_call.1} parent=1 // pred_region
      %42 = dma.done [#allocation6], 256
    $region21: #{tpu_custom_call.1} parent=1 // pred_fallthru
      _
    %v43 = vld [vmem:[#allocation2] sm:$0xff]
    %v44 = vld [vmem:[#allocation2 + $0x8] sm:$0xff]
    %v45 = vld [vmem:[%s2] sm:$0x1]
    %vm46 = vcmask 261120
    %v47 = vsel %vm46, %v43, 0.0
    %48 = vadd.xlane.f32.xlu0 %v47
    %v49 = vpop.xlane.xlu0 %48
    %v50 = vsel %vm46, %v44, 0.0
    %51 = vadd.xlane.f32.xlu0 %v50
    %v52 = vpop.xlane.xlu0 %51
    %v53 = vmul.f32 %v49, 0.03125
    %v54 = vmul.f32 %v52, 0.03125
    %v55 = vsub.f32 %v43, %v53
    %v56 = vsub.f32 %v44, %v54
    %v57 = vmul.f32 %v55, %v55
    %v58 = vmul.f32 %v56, %v56
    %v59 = vsel %vm46, %v57, 0.0
    %60 = vadd.xlane.f32.xlu0 %v59
    %v61 = vpop.xlane.xlu0 %60
    %v62 = vsel %vm46, %v58, 0.0
    %63 = vadd.xlane.f32.xlu0 %v62
    %v64 = vpop.xlane.xlu0 %63
    %v65 = vmul.f32 %v61, 0.03125
    %v66 = vmul.f32 %v64, 0.03125
    %v67 = vadd.f32 %v65, 1e-05
    %v68 = vadd.f32 %v66, 1e-05
    %v69 = vrsqrt.pop %v67
    %v70 = vrsqrt.pop %v68
    %v71 = vmul.f32 %v55, %v69
    %v72 = vmul.f32 %v56, %v70
    %v74 = vlaneseq
    %v75 = vshrl.u32 %v74, 7
    %v76 = vsub.s32 0, %v75
    %v77 = vrot.slane %v45, %v76
    %v79 = vmul.f32 %v71, %v77
    %v80 = vmul.f32 %v72, %v77
    %v81 = vld [vmem:[#allocation5] sm:$0xff]
    %v82 = vld [vmem:[#allocation5 + $0x8] sm:$0xff]
    %v83 = vxor.u32 %v81, 2147483648
    %v84 = vxor.u32 %v82, 2147483648
    %v85 = vmul.f32 %v83, 1.442695
    %v86 = vpow.pop %v85
    %v87 = vmul.f32 %v84, 1.442695
    %v88 = vpow.pop %v87
    %v89 = vadd.f32 %v86, 1.0
    %v90 = vadd.f32 %v88, 1.0
    %v91 = vrcp.pop %v89
    %v92 = vmul.f32 1.0, %v91
    %v93 = vrcp.pop %v90
    %v94 = vmul.f32 1.0, %v93
    %v95 = vmul.f32 %v81, %v92
    %v96 = vmul.f32 %v82, %v94
    %v97 = vmul.f32 %v79, %v95
    %v98 = vmul.f32 %v80, %v96
    %99 = vst.msk [vmem:[#allocation7] sm:$0xff] %vm46, %v97
    %100 = vst.msk [vmem:[#allocation7 + $0x8] sm:$0xff] %vm46, %v98
    // Predicated region
    $region22: #{tpu_custom_call.1} parent=1 // pred_check
      _
    $region23: #{tpu_custom_call.1} parent=1 // pred_check_branch
      %102 = sbr.rel (0) target = $region25
    $region24: #{tpu_custom_call.1} parent=1 // pred_region
      %s104 = ssub.s32 256, 256
      %105 = vsyncadd [#allocation4], %s104
      %s106 = sshll.u32 [#allocation7], 4
      %s107 = int_to_ptr.vmem [resolvable:$true] %s106
      %112 = dma.vmem_to_hbm [thread:$0]  %s107, 256, %s3, [#allocation4], 128, 128, 8
    $region25: #{tpu_custom_call.1} parent=1 // pred_fallthru
      _
    // Predicated region
    $region26: #{tpu_custom_call.1} parent=1 // pred_check
      _
    $region27: #{tpu_custom_call.1} parent=1 // pred_check_branch
      %114 = sbr.rel (0) target = $region29
    $region28: #{tpu_custom_call.1} parent=1 // pred_region
      %115 = dma.done [#allocation4], 256
    $region29: #{tpu_custom_call.1} parent=1 // pred_fallthru
      _
    %116 = vsyncpa [#allocation3], 1
    %117 = vsyncpa [#allocation6], 1
    %118 = vsyncpa [#allocation4], 1

</llo_original>
